<compile_context>
chip_gen: v5e
topology: v5e:2x2
jax: 0.10.0
libtpu: 0.0.40
codegen_flags: <defaults>
</compile_context>

<pallas_src>
import functools

import jax
import jax.numpy as jnp
from jax.experimental import pallas as pl
from jax.experimental.pallas import tpu as pltpu


def _reward_criterion_kernel(inp_ref, seq_ref, rew_ref, out_ref, acc_ref, *,
                             batch_size):
    i = pl.program_id(0)

    # ---- init the resident accumulator on the first grid step ----
    @pl.when(i == 0)
    def _():
        acc_ref[0] = jnp.float32(0.0)   # sum(inp * reward * mask)   (sign flipped at the end)
        acc_ref[1] = jnp.float32(0.0)   # sum(mask)

    inp = inp_ref[...].astype(jnp.float32)   # upcast after load (bf16-friendly)
    rew = rew_ref[...].astype(jnp.float32)
    seq = seq_ref[...]
    blk_b, t = inp.shape

    # Shifted mask: column 0 -> 1.0, column j>0 -> (seq[:, j-1] > 0).
    # The roll wraps seq[:, T-1] into column 0, but the col==0 select overrides
    # it; valid because T is never tiled (full last dim per block).  roll goes
    # through the XLU, off the VPU critical path.
    col = jax.lax.broadcasted_iota(jnp.int32, (blk_b, t), 1)
    seq_shifted = pltpu.roll(seq, shift=1, axis=1)
    mask = jnp.where(col == 0, 1.0, (seq_shifted > 0).astype(jnp.float32))

    # Ragged-grid guard: rows past the true batch size contribute nothing
    # (otherwise each padded row would force a 1.0 into the denominator at
    # col 0, and inp/rew padding may contain arbitrary data).
    row = jax.lax.broadcasted_iota(jnp.int32, (blk_b, t), 0) + i * blk_b
    valid = row < batch_size
    mask = jnp.where(valid, mask, 0.0)

    # mask is exactly {0, 1}: select instead of multiply also zeroes any
    # garbage (NaN/inf) living in the padded region of inp/rew.
    weighted = jnp.where(mask > 0.0, inp * rew, 0.0)

    acc_ref[0] += jnp.sum(weighted)
    acc_ref[1] += jnp.sum(mask)

    # ---- finalize: single exact divide (and sign flip) on the last step ----
    @pl.when(i == pl.num_programs(0) - 1)
    def _():
        total = -(acc_ref[0] / acc_ref[1])
        out_ref[...] = jnp.full((1, 1), total, dtype=jnp.float32)


def reward_criterion(inp, seq, reward, *, block_b=None,
                     vmem_budget_bytes=24 * 1024 * 1024):
    """inp: [B, T] log-probs (f32/bf16), seq: [B, T] int token ids (0 = pad),
    reward: [B, T] (f32/bf16).  Returns scalar f32 loss."""
    B, T = inp.shape
    assert seq.shape == (B, T) and reward.shape == (B, T)

    itembytes = (jnp.dtype(inp.dtype).itemsize
                 + jnp.dtype(seq.dtype).itemsize
                 + jnp.dtype(reward.dtype).itemsize)

    # Pick the largest row tile whose double-buffered input streams fit the
    # VMEM budget (safe for v7x's smaller scoped VMEM as well as v5e/v6e).
    if block_b is None:
        max_rows = max(8, (vmem_budget_bytes // (2 * T * itembytes)) // 8 * 8)
        block_b = B if B <= max_rows else min(512, max_rows)
    block_b = min(block_b, B)
    if block_b < B:
        # When actually tiling, keep the sublane dim a multiple of 8.
        block_b = max(8, (block_b // 8) * 8)
        block_b = min(block_b, B)

    grid = (pl.cdiv(B, block_b),)
    kernel = functools.partial(_reward_criterion_kernel, batch_size=B)

    out = pl.pallas_call(
        kernel,
        out_shape=jax.ShapeDtypeStruct((1, 1), jnp.float32),
        grid_spec=pltpu.PrefetchScalarGridSpec(
            num_scalar_prefetch=0,
            grid=grid,
            in_specs=[
                pl.BlockSpec((block_b, T), lambda i: (i, 0)),
                pl.BlockSpec((block_b, T), lambda i: (i, 0)),
                pl.BlockSpec((block_b, T), lambda i: (i, 0)),
            ],
            out_specs=pl.BlockSpec((1, 1), lambda i: (0, 0)),
            scratch_shapes=[pltpu.SMEM((2,), jnp.float32)],
        ),
        compiler_params=pltpu.CompilerParams(
            dimension_semantics=("arbitrary",),   # grid axis carries the accumulator
            vmem_limit_bytes=32 * 1024 * 1024,
        ),
        cost_estimate=pl.CostEstimate(
            flops=5 * B * T,
            transcendentals=0,
            bytes_accessed=B * T * itembytes + 4,
        ),
    )(inp, seq, reward)
    return out[0, 0]


def _reference(inp, seq, reward):
    # Pure-JAX reference mirroring the PyTorch forward.
    inp = inp.astype(jnp.float32)
    reward = reward.astype(jnp.float32)
    mask = (seq > 0).astype(jnp.float32)
    mask = jnp.concatenate(
        [jnp.ones((mask.shape[0], 1), jnp.float32), mask[:, :-1]], axis=1)
    out = -inp * reward * mask
    return jnp.sum(out) / jnp.sum(mask)


if __name__ == "__main__":
    key = jax.random.PRNGKey(0)
    k1, k2, k3, k4, k5, k6 = jax.random.split(key, 6)

    # Small sanity case (single full-array block).
    B, T = 2, 8
    inp = -jnp.abs(jax.random.normal(k1, (B, T), dtype=jnp.float32))
    reward = jax.random.uniform(k2, (B, T), dtype=jnp.float32, minval=-1.0, maxval=1.0)
    seq = jax.random.randint(k3, (B, T), minval=0, maxval=5, dtype=jnp.int32)

    result = reward_criterion(inp, seq, reward)
    jax.block_until_ready(result)
    ref = _reference(inp, seq, reward)
    assert jnp.allclose(result, ref, rtol=1e-5, atol=1e-5), (result, ref)

    # Larger case exercising the streaming grid and the ragged final row tile.
    B2, T2 = 20, 128
    inp2 = -jnp.abs(jax.random.normal(k4, (B2, T2), dtype=jnp.float32))
    reward2 = jax.random.uniform(k5, (B2, T2), dtype=jnp.float32, minval=-1.0, maxval=1.0)
    seq2 = jax.random.randint(k6, (B2, T2), minval=0, maxval=3, dtype=jnp.int32)

    result2 = reward_criterion(inp2, seq2, reward2, block_b=8)   # grid=3, last tile ragged
    jax.block_until_ready(result2)
    ref2 = _reference(inp2, seq2, reward2)
    assert jnp.allclose(result2, ref2, rtol=1e-5, atol=1e-5), (result2, ref2)

    print("KERNEL_OK")
</pallas_src>

<mosaic_0001>
module attributes {stable_mosaic.version = 11 : i64} {
  func.func @_reward_criterion_kernel(%arg0: i32, %arg1: memref<2x8xf32, #tpu.memory_space<vmem>>, %arg2: memref<2x8xi32, #tpu.memory_space<vmem>>, %arg3: memref<2x8xf32, #tpu.memory_space<vmem>>, %arg4: memref<1x1xf32, #tpu.memory_space<vmem>>, %arg5: memref<2xf32, #tpu.memory_space<smem>>) attributes {dimension_semantics = [#tpu.dimension_semantics<arbitrary>], iteration_bounds = array<i64: 1>, scalar_prefetch = 0 : i64, scratch_operands = 1 : i64, tpu.core_type = #tpu.core_type<tc>, window_params = [{transform_indices = @transform_0, window_bounds = array<i64: 2, 8>}, {transform_indices = @transform_1, window_bounds = array<i64: 2, 8>}, {transform_indices = @transform_2, window_bounds = array<i64: 2, 8>}, {pipeline_mode = #tpu.pipeline_mode<synchronous>, transform_indices = @transform_3, window_bounds = array<i64: 1, 1>}]} {
    %c0_i32 = arith.constant 0 : i32
    %0 = arith.cmpi eq, %arg0, %c0_i32 : i32
    %1 = arith.extui %0 : i1 to i32
    %c0_i32_0 = arith.constant 0 : i32
    %2 = arith.cmpi ne, %1, %c0_i32_0 : i32
    scf.if %2 {
      %cst_19 = arith.constant 0.000000e+00 : f32
      %c0_20 = arith.constant 0 : index
      %46 = memref.load %arg5[%c0_20] : memref<2xf32, #tpu.memory_space<smem>>
      memref.store %cst_19, %arg5[%c0_20] : memref<2xf32, #tpu.memory_space<smem>>
      %cst_21 = arith.constant 0.000000e+00 : f32
      %c1_22 = arith.constant 1 : index
      %47 = memref.load %arg5[%c1_22] : memref<2xf32, #tpu.memory_space<smem>>
      memref.store %cst_21, %arg5[%c1_22] : memref<2xf32, #tpu.memory_space<smem>>
    } else {
    }
    %c0 = arith.constant 0 : index
    %c0_1 = arith.constant 0 : index
    %3 = vector.load %arg1[%c0, %c0_1] : memref<2x8xf32, #tpu.memory_space<vmem>>, vector<2x8xf32>
    %c0_2 = arith.constant 0 : index
    %c0_3 = arith.constant 0 : index
    %4 = vector.load %arg3[%c0_2, %c0_3] : memref<2x8xf32, #tpu.memory_space<vmem>>, vector<2x8xf32>
    %c0_4 = arith.constant 0 : index
    %c0_5 = arith.constant 0 : index
    %5 = vector.load %arg2[%c0_4, %c0_5] : memref<2x8xi32, #tpu.memory_space<vmem>>, vector<2x8xi32>
    %6 = tpu.iota {dimensions = array<i32: 1>} : vector<2x8xi32>
    %c1_i32 = arith.constant 1 : i32
    %7 = tpu.dynamic_rotate %5 by %c1_i32 dim 1 : vector<2x8xi32>, i32 -> vector<2x8xi32>
    %c0_i32_6 = arith.constant 0 : i32
    %8 = vector.broadcast %c0_i32_6 : i32 to vector<2x8xi32>
    %9 = arith.cmpi eq, %6, %8 : vector<2x8xi32>
    %c0_i32_7 = arith.constant 0 : i32
    %10 = vector.broadcast %c0_i32_7 : i32 to vector<2x8xi32>
    %11 = arith.cmpi sgt, %7, %10 : vector<2x8xi32>
    %12 = arith.extui %11 : vector<2x8xi1> to vector<2x8xi32>
    %13 = arith.sitofp %12 : vector<2x8xi32> to vector<2x8xf32>
    %cst = arith.constant 1.000000e+00 : f32
    %14 = vector.broadcast %cst : f32 to vector<2x8xf32>
    %15 = arith.select %9, %14, %13 : vector<2x8xi1>, vector<2x8xf32>
    %16 = tpu.iota {dimensions = array<i32: 0>} : vector<2x8xi32>
    %c2_i32 = arith.constant 2 : i32
    %17 = arith.muli %arg0, %c2_i32 : i32
    %18 = vector.broadcast %17 : i32 to vector<2x8xi32>
    %19 = arith.addi %16, %18 : vector<2x8xi32>
    %c2_i32_8 = arith.constant 2 : i32
    %20 = vector.broadcast %c2_i32_8 : i32 to vector<2x8xi32>
    %21 = arith.cmpi slt, %19, %20 : vector<2x8xi32>
    %cst_9 = arith.constant 0.000000e+00 : f32
    %22 = vector.broadcast %cst_9 : f32 to vector<2x8xf32>
    %23 = arith.select %21, %15, %22 : vector<2x8xi1>, vector<2x8xf32>
    %cst_10 = arith.constant 0.000000e+00 : f32
    %24 = vector.broadcast %cst_10 : f32 to vector<2x8xf32>
    %25 = arith.cmpf ogt, %23, %24 : vector<2x8xf32>
    %26 = arith.mulf %3, %4 : vector<2x8xf32>
    %cst_11 = arith.constant 0.000000e+00 : f32
    %27 = vector.broadcast %cst_11 : f32 to vector<2x8xf32>
    %28 = arith.select %25, %26, %27 : vector<2x8xi1>, vector<2x8xf32>
    %c0_12 = arith.constant 0 : index
    %29 = memref.load %arg5[%c0_12] : memref<2xf32, #tpu.memory_space<smem>>
    %30 = vector.shape_cast %28 : vector<2x8xf32> to vector<1x2x8xf32>
    %cst_13 = arith.constant dense<0.000000e+00> : vector<1xf32>
    %31 = vector.multi_reduction <add>, %30, %cst_13 [1, 2] : vector<1x2x8xf32> to vector<1xf32>
    %32 = vector.shape_cast %31 : vector<1xf32> to vector<1x1x1xf32>
    %33 = vector.extract %32[0, 0, 0] : f32 from vector<1x1x1xf32>
    %34 = arith.addf %29, %33 : f32
    %c0_14 = arith.constant 0 : index
    %35 = memref.load %arg5[%c0_14] : memref<2xf32, #tpu.memory_space<smem>>
    memref.store %34, %arg5[%c0_14] : memref<2xf32, #tpu.memory_space<smem>>
    %c1 = arith.constant 1 : index
    %36 = memref.load %arg5[%c1] : memref<2xf32, #tpu.memory_space<smem>>
    %37 = vector.shape_cast %23 : vector<2x8xf32> to vector<1x2x8xf32>
    %cst_15 = arith.constant dense<0.000000e+00> : vector<1xf32>
    %38 = vector.multi_reduction <add>, %37, %cst_15 [1, 2] : vector<1x2x8xf32> to vector<1xf32>
    %39 = vector.shape_cast %38 : vector<1xf32> to vector<1x1x1xf32>
    %40 = vector.extract %39[0, 0, 0] : f32 from vector<1x1x1xf32>
    %41 = arith.addf %36, %40 : f32
    %c1_16 = arith.constant 1 : index
    %42 = memref.load %arg5[%c1_16] : memref<2xf32, #tpu.memory_space<smem>>
    memref.store %41, %arg5[%c1_16] : memref<2xf32, #tpu.memory_space<smem>>
    %c0_i32_17 = arith.constant 0 : i32
    %43 = arith.cmpi eq, %arg0, %c0_i32_17 : i32
    %44 = arith.extui %43 : i1 to i32
    %c0_i32_18 = arith.constant 0 : i32
    %45 = arith.cmpi ne, %44, %c0_i32_18 : i32
    scf.if %45 {
      %c0_19 = arith.constant 0 : index
      %46 = memref.load %arg5[%c0_19] : memref<2xf32, #tpu.memory_space<smem>>
      %c1_20 = arith.constant 1 : index
      %47 = memref.load %arg5[%c1_20] : memref<2xf32, #tpu.memory_space<smem>>
      %48 = arith.divf %46, %47 : f32
      %cst_21 = arith.constant 0.000000e+00 : f32
      %49 = arith.subf %cst_21, %48 : f32
      %50 = vector.broadcast %49 : f32 to vector<1x1xf32>
      %c0_22 = arith.constant 0 : index
      %c0_23 = arith.constant 0 : index
      %51 = vector.load %arg4[%c0_22, %c0_23] : memref<1x1xf32, #tpu.memory_space<vmem>>, vector<1x1xf32>
      tpu.vector_store %arg4[%c0_22, %c0_23], %50 {strides = array<i32>} : memref<1x1xf32, #tpu.memory_space<vmem>>, vector<1x1xf32>,
    } else {
    }
    return
  }
  func.func @transform_0(%arg0: i32) -> (i32, i32) {
    %c0_i32 = arith.constant 0 : i32
    %c0_i32_0 = arith.constant 0 : i32
    return %arg0, %c0_i32 : i32, i32
  }
  func.func @transform_1(%arg0: i32) -> (i32, i32) {
    %c0_i32 = arith.constant 0 : i32
    %c0_i32_0 = arith.constant 0 : i32
    return %arg0, %c0_i32 : i32, i32
  }
  func.func @transform_2(%arg0: i32) -> (i32, i32) {
    %c0_i32 = arith.constant 0 : i32
    %c0_i32_0 = arith.constant 0 : i32
    return %arg0, %c0_i32 : i32, i32
  }
  func.func @transform_3(%arg0: i32) -> (i32, i32) {
    %c0_i32 = arith.constant 0 : i32
    %c0_i32_0 = arith.constant 0 : i32
    %c0_i32_1 = arith.constant 0 : i32
    return %c0_i32, %c0_i32_0 : i32, i32
  }
}

</mosaic_0001>

<llo_original>
// kernel: tpu_custom_call.1
$region0: #{tpu_custom_call.1}
  #allocation0 [shape = 'u32[]', space=smem, size = 0x4, offset = 0x4, fixed_abs, tag = 'smem constant byte address 0x4 - core index']
  #allocation1 [shape = 'u32[72,128]{1,0:T(1,128)}', space=vmem, size = 0x9000, scoped, tag = 'internal scratch']
  #allocation2 [shape = 'f32[2]{0:T(128)}', space=smem, size = 0x200, scoped, tag = 'scratch operand']
  %s0 = inlined_call_operand.hbm [shape: f32[2,8], index: 0, kind: input, shape index: {}]
  %s1 = inlined_call_operand.hbm [shape: s32[2,8], index: 1, kind: input, shape index: {}]
  %s2 = inlined_call_operand.hbm [shape: f32[2,8], index: 2, kind: input, shape index: {}]
  %s3 = inlined_call_operand.hbm [shape: f32[1,1], index: 3, kind: output, shape index: {}]
  %s4 = sld [smem:[#allocation0]]
  $region42: #{tpu_custom_call.1} parent=0
    _
  %s6 = ssub.s32 1, %s4
  %s7 = scalar_select 0, %s6, %s4
  $region1: #{tpu_custom_call.1} parent=0
    #allocation3 [shape = 'u8[1024]{0}', space=vmem, size = 0x400, scoped, tag = 'input window, operand 0, single buffered']
    #allocation4 [shape = 's32[1]{0}', space=sflag, size = 0x4, scoped, tag = 'scoped memory for tpu_custom_call.1']
    #allocation5 [shape = 's32[1]{0}', space=sflag, size = 0x4, scoped, tag = 'scoped memory for tpu_custom_call.1']
    #allocation6 [shape = 'u8[1024]{0}', space=vmem, size = 0x400, scoped, tag = 'input window, operand 1, single buffered']
    #allocation7 [shape = 's32[1]{0}', space=sflag, size = 0x4, scoped, tag = 'scoped memory for tpu_custom_call.1']
    #allocation8 [shape = 'u8[1024]{0}', space=vmem, size = 0x400, scoped, tag = 'input window, operand 2, single buffered']
    #allocation9 [shape = 'u8[512]{0}', space=vmem, size = 0x400, scoped, tag = 'output window, operand 0, single buffered']
    %8 = vsyncpa [#allocation4], 0
    %9 = vsyncpa [#allocation7], 0
    %10 = vsyncpa [#allocation5], 0
    // Predicated region
    $region2: #{tpu_custom_call.1} parent=1 // pred_check
      _
    $region3: #{tpu_custom_call.1} parent=1 // pred_check_branch
      %12 = sbr.rel (0) target = $region5
    $region4: #{tpu_custom_call.1} parent=1 // pred_region
      %14 = vsyncadd [#allocation4], 0
      %s16 = sshll.u32 %s0, 4
      %s17 = int_to_ptr.hbm [resolvable:$true] %s16
      %s18 = sshll.u32 [#allocation3], 4
      %s19 = int_to_ptr.vmem [resolvable:$true] %s18
      %21 = dma.hbm_to_vmem [thread:$0]  %s17, 32, %s19, [#allocation4]
    $region5: #{tpu_custom_call.1} parent=1 // pred_fallthru
      _
    // Predicated region
    $region6: #{tpu_custom_call.1} parent=1 // pred_check
      _
    $region7: #{tpu_custom_call.1} parent=1 // pred_check_branch
      %23 = sbr.rel (0) target = $region9
    $region8: #{tpu_custom_call.1} parent=1 // pred_region
      %25 = vsyncadd [#allocation7], 0
      %s27 = sshll.u32 %s1, 4
      %s28 = int_to_ptr.hbm [resolvable:$true] %s27
      %s29 = sshll.u32 [#allocation6], 4
      %s30 = int_to_ptr.vmem [resolvable:$true] %s29
      %32 = dma.hbm_to_vmem [thread:$0]  %s28, 32, %s30, [#allocation7]
    $region9: #{tpu_custom_call.1} parent=1 // pred_fallthru
      _
    // Predicated region
    $region10: #{tpu_custom_call.1} parent=1 // pred_check
      _
    $region11: #{tpu_custom_call.1} parent=1 // pred_check_branch
      %34 = sbr.rel (0) target = $region13
    $region12: #{tpu_custom_call.1} parent=1 // pred_region
      %36 = vsyncadd [#allocation7], 0
      %s38 = sshll.u32 %s2, 4
      %s39 = int_to_ptr.hbm [resolvable:$true] %s38
      %s40 = sshll.u32 [#allocation8], 4
      %s41 = int_to_ptr.vmem [resolvable:$true] %s40
      %43 = dma.hbm_to_vmem [thread:$0]  %s39, 32, %s41, [#allocation7]
    $region13: #{tpu_custom_call.1} parent=1 // pred_fallthru
      _
    // Predicated region
    $region14: #{tpu_custom_call.1} parent=1 // pred_check
      _
    $region15: #{tpu_custom_call.1} parent=1 // pred_check_branch
      %45 = sbr.rel (0) target = $region17
    $region16: #{tpu_custom_call.1} parent=1 // pred_region
      %47 = dma.done [#allocation4], 32
    $region17: #{tpu_custom_call.1} parent=1 // pred_fallthru
      _
    // Predicated region
    $region18: #{tpu_custom_call.1} parent=1 // pred_check
      _
    $region19: #{tpu_custom_call.1} parent=1 // pred_check_branch
      %49 = sbr.rel (0) target = $region21
    $region20: #{tpu_custom_call.1} parent=1 // pred_region
      %51 = dma.done [#allocation7], 32
    $region21: #{tpu_custom_call.1} parent=1 // pred_fallthru
      _
    // Predicated region
    $region22: #{tpu_custom_call.1} parent=1 // pred_check
      _
    $region23: #{tpu_custom_call.1} parent=1 // pred_check_branch
      %53 = sbr.rel (0) target = $region25
    $region24: #{tpu_custom_call.1} parent=1 // pred_region
      %55 = dma.done [#allocation7], 32
    $region25: #{tpu_custom_call.1} parent=1 // pred_fallthru
      _
    %p56 = scmp.eq.s32.totalorder 0, 0
    // Predicated region
    $region26: #{tpu_custom_call.1} parent=1 // pred_check
      %p57 = pneg %p56
    $region27: #{tpu_custom_call.1} parent=1 // pred_check_branch
      %59 = sbr.rel (%p57) target = $region29
    $region28: #{tpu_custom_call.1} parent=1 // pred_region
      %s60 = scalar_lea.smem [#allocation2], 0
      %61 = sst [smem:[%s60]] 0.0
      %s62 = scalar_lea.smem [#allocation2], 1
      %63 = sst [smem:[%s62]] 0.0
    $region29: #{tpu_custom_call.1} parent=1 // pred_fallthru
      _
    %v64 = vld [vmem:[#allocation3] sm:$0x3]
    %v65 = vld [vmem:[#allocation8] sm:$0x3]
    %v66 = vld [vmem:[#allocation6] sm:$0x3]
    %v67 = vlaneseq
    %v68 = vand.u32 %v67, 127
    %vm69 = vcmask 1047616
    %70 = vrot.lane.b32.xlu0 %v66, 8
    %v71 = vpop.permute.xlu0 %70
    %v72 = vsel %vm69, %v71, %v66
    %73 = vrot.lane.b32.xlu0 %v72, 8
    %v74 = vpop.permute.xlu0 %73
    %v75 = vsel %vm69, %v74, %v66
    %vm76 = vcmp.eq.s32.totalorder %v68, 0
    %vm77 = vcmp.gt.s32.totalorder %v75, 0
    %v78 = vsel %vm77, 1, 0
    %v79 = vcvt.s32.f32 %v78
    %81 = vrot.lane.b32.xlu0 %v79, 121
    %v82 = vpop.permute.xlu0 %81
    %v84 = vsel %vm76, 1.0, %v82
    %v85 = vlaneseq
    %v86 = vshrl.u32 %v85, 7
    %s87 = smul.u32 0, 2
    %v88 = vstv %s87
    %v89 = vadd.s32 %v86, %v88
    %vm90 = vcmp.lt.s32.totalorder %v89, 2
    %v91 = vsel %vm90, %v84, 0.0
    %vm92 = vcmp.gt.f32.partialorder %v91, 0.0
    %v93 = vmul.f32 %v64, %v65
    %v94 = vsel %vm92, %v93, 0.0
    %s95 = sld [smem:[#allocation2]]
    %vm96 = vcmask 58368
    %v97 = vsel %vm96, %v94, 0.0
    %98 = vadd.xlane.f32.xlu0 %v97
    %v99 = vpop.xlane.xlu0 %98
    %v100 = vrot.slane %v99, 4
    %v101 = vadd.f32 %v99, %v100
    %v102 = vrot.slane %v101, 2
    %v103 = vadd.f32 %v101, %v102
    %v104 = vrot.slane %v103, 1
    %v105 = vadd.f32 %v103, %v104
    %s106 = vtos %v105
    %s107 = sadd.f32 %s95, %s106
    %s108 = scalar_lea.smem [#allocation2], 0
    %109 = sst [smem:[%s108]] %s107
    %s110 = sld [smem:[#allocation2 + $0x1]]
    %v111 = vsel %vm96, %v91, 0.0
    %112 = vadd.xlane.f32.xlu0 %v111
    %v113 = vpop.xlane.xlu0 %112
    %v114 = vrot.slane %v113, 4
    %v115 = vadd.f32 %v113, %v114
    %v116 = vrot.slane %v115, 2
    %v117 = vadd.f32 %v115, %v116
    %v118 = vrot.slane %v117, 1
    %v119 = vadd.f32 %v117, %v118
    %s120 = vtos %v119
    %s121 = sadd.f32 %s110, %s120
    %s122 = scalar_lea.smem [#allocation2], 1
    %123 = sst [smem:[%s122]] %s121
    // Predicated region
    $region30: #{tpu_custom_call.1} parent=1 // pred_check
      %p124 = pneg %p56
    $region31: #{tpu_custom_call.1} parent=1 // pred_check_branch
      %126 = sbr.rel (%p124) target = $region33
    $region32: #{tpu_custom_call.1} parent=1 // pred_region
      %s127 = sld [smem:[#allocation2]]
      %s128 = sld [smem:[#allocation2 + $0x1]]
      %v129 = vstv %s128
      %v130 = vrcp.pop %v129
      %v131 = vmul.f32 %v129, %v130
      %v132 = vsub.f32 1.0, %v131
      %v133 = vmul.f32 %v130, %v132
      %v134 = vadd.f32 %v130, %v133
      %vm135 = vweird.f32 %v129
      %vm136 = vweird.f32 %v130
      %vm137 = vmor %vm135, %vm136
      %v138 = vsel %vm137, %v130, %v134
      %v139 = vand.u32 2147483647, %v129
      %vm140 = vcmp.eq.f32.partialorder %v139, 8.507059e+37
      %v141 = vand.u32 %v129, 2147483648
      %v142 = vor.u32 1.1754944e-38, %v141
      %v143 = vsel %vm140, %v142, %v138
      %s144 = vtos %v143
      %s145 = smul.f32 %s127, %s144
      %s146 = ssub.f32 0.0, %s145
      %v147 = vstv %s146
      %vm148 = vcmask 0
      %149 = vst.msk [vmem:[#allocation9] sm:$0x1] %vm148, %v147
    $region33: #{tpu_custom_call.1} parent=1 // pred_fallthru
      _
    // Predicated region
    $region34: #{tpu_custom_call.1} parent=1 // pred_check
      _
    $region35: #{tpu_custom_call.1} parent=1 // pred_check_branch
      %151 = sbr.rel (0) target = $region37
    $region36: #{tpu_custom_call.1} parent=1 // pred_region
      %153 = vsyncadd [#allocation5], 0
      %s155 = sshll.u32 [#allocation9], 4
      %s156 = int_to_ptr.vmem [resolvable:$true] %s155
      %s157 = sshll.u32 %s3, 4
      %s158 = int_to_ptr.hbm [resolvable:$true] %s157
      %160 = dma.vmem_to_hbm [thread:$0]  %s156, 16, %s158, [#allocation5]
    $region37: #{tpu_custom_call.1} parent=1 // pred_fallthru
      _
    // Predicated region
    $region38: #{tpu_custom_call.1} parent=1 // pred_check
      _
    $region39: #{tpu_custom_call.1} parent=1 // pred_check_branch
      %162 = sbr.rel (0) target = $region41
    $region40: #{tpu_custom_call.1} parent=1 // pred_region
      %164 = dma.done [#allocation5], 16
    $region41: #{tpu_custom_call.1} parent=1 // pred_fallthru
      _
    %165 = vsyncpa [#allocation4], 1
    %166 = vsyncpa [#allocation7], 1
    %167 = vsyncpa [#allocation5], 1

</llo_original>
